<compile_context>
chip_gen: v7x
topology: tpu7x:2x2x1
jax: 0.10.0
libtpu: 0.0.40
codegen_flags: <defaults>
</compile_context>

<pallas_src>
import functools

import jax
import jax.numpy as jnp
from jax import lax
from jax.experimental import pallas as pl
from jax.experimental.pallas import tpu as pltpu

TEMPERATURE = 0.1
BASE_TEMPERATURE = 0.1

_NEG = -1e30  # large-negative (finite) fill for masked logits


def _round_up(x, m):
    return (x + m - 1) // m * m


def _supcon_kernel(feat_r_ref, feat_c_ref, lab_r_ref, lab_c_ref, out_ref,
                   m_s, l_s, p_s, c_s, *, n_valid, tile, loss_scale):
    # feat_r_ref: [tile, D] bf16 anchor rows (already scaled by sqrt(1/temperature))
    # feat_c_ref: [tile, D] bf16 contrast cols (same scaling)
    # lab_r_ref : [tile, 1] int32 anchor labels;  lab_c_ref: [1, tile] int32 contrast labels
    ri = pl.program_id(0)
    ci = pl.program_id(1)

    @pl.when(ci == 0)
    def _init():
        m_s[...] = jnp.full_like(m_s, _NEG)
        l_s[...] = jnp.zeros_like(l_s)
        p_s[...] = jnp.zeros_like(p_s)
        c_s[...] = jnp.zeros_like(c_s)

    # raw logits for this block: contract last dims of both operands (no transpose),
    # bf16 operands, f32 accumulation. 1/temperature already folded into the features.
    raw = lax.dot_general(
        feat_r_ref[...], feat_c_ref[...],
        dimension_numbers=(((1,), (1,)), ((), ())),
        preferred_element_type=jnp.float32)

    # Rebuild masks in-kernel: drop self-contrast (diagonal) and padded columns.
    row_ids = ri * tile + lax.broadcasted_iota(jnp.int32, (tile, tile), 0)
    col_ids = ci * tile + lax.broadcasted_iota(jnp.int32, (tile, tile), 1)
    logits_mask = (col_ids < n_valid) & (row_ids != col_ids)

    lab_r = jnp.broadcast_to(lab_r_ref[...], (tile, tile))
    lab_c = jnp.broadcast_to(lab_c_ref[...], (tile, tile))
    pos = ((lab_r == lab_c) & logits_mask).astype(jnp.float32)

    # Online log-sum-exp over valid contrast columns (f32 throughout).
    raw_m = jnp.where(logits_mask, raw, _NEG)
    blk_max = jnp.max(raw_m, axis=1, keepdims=True)
    m_old = m_s[...]
    m_new = jnp.maximum(m_old, blk_max)
    alpha = jnp.exp(m_old - m_new)
    l_s[...] = alpha * l_s[...] + jnp.sum(jnp.exp(raw_m - m_new), axis=1, keepdims=True)
    m_s[...] = m_new

    # Accumulate sum of positive-pair logits and positive-pair counts.
    p_s[...] += jnp.sum(pos * raw, axis=1, keepdims=True)
    c_s[...] += jnp.sum(pos, axis=1, keepdims=True)

    @pl.when(ci == pl.num_programs(1) - 1)
    def _finalize():
        # mean_log_prob_pos_i = (sum_j pos*raw)/count - logsumexp_i   (row max cancels)
        lse = m_s[...] + jnp.log(l_s[...])
        mean_log_prob_pos = p_s[...] * pl.reciprocal(c_s[...], approx=True) - lse
        # Anchors with zero positives give 0*inf = NaN, matching the PyTorch module.
        out_ref[...] = (-loss_scale) * mean_log_prob_pos


def _supcon_reference(features, base_mask, temperature=TEMPERATURE,
                      base_temperature=BASE_TEMPERATURE, contrast_mode='all'):
    """Plain-JAX mirror of the PyTorch forward (f32 throughout)."""
    bsz, n_views, d = features.shape
    cf = jnp.transpose(features, (1, 0, 2)).reshape(n_views * bsz, d).astype(jnp.float32)
    if contrast_mode == 'one':
        anchor, anchor_count = cf[:bsz], 1
    else:
        anchor, anchor_count = cf, n_views
    logits = anchor @ cf.T / temperature
    logits = logits - jnp.max(logits, axis=1, keepdims=True)
    mask = jnp.tile(base_mask.astype(jnp.float32), (anchor_count, n_views))
    n_anchor = anchor_count * bsz
    idx = jnp.arange(n_anchor)
    logits_mask = jnp.ones_like(mask).at[idx, idx].set(0.0)
    mask = mask * logits_mask
    exp_logits = jnp.exp(logits) * logits_mask
    log_prob = logits - jnp.log(exp_logits.sum(1, keepdims=True))
    mean_log_prob_pos = (mask * log_prob).sum(1) / mask.sum(1)
    loss = -(temperature / base_temperature) * mean_log_prob_pos
    return loss.mean()


def supcon_loss(features, labels=None, mask=None, temperature=TEMPERATURE,
                base_temperature=BASE_TEMPERATURE, contrast_mode='all'):
    """features: [bsz, n_views, ...] float. Returns scalar loss (matches PyTorch SupConLoss)."""
    features = jnp.asarray(features)
    if features.ndim < 3:
        raise ValueError('`features` needs to be [bsz, n_views, ...]')
    if features.ndim > 3:
        features = features.reshape(features.shape[0], features.shape[1], -1)
    bsz, n_views, d = features.shape

    if labels is not None and mask is not None:
        raise ValueError('Cannot define both `labels` and `mask`')

    if mask is not None:
        # TODO(synk): arbitrary (possibly asymmetric) user masks are not expressible as
        # per-row labels for the in-kernel mask rebuild; served by the fused plain-JAX path.
        return _supcon_reference(features, jnp.asarray(mask, jnp.float32),
                                 temperature, base_temperature, contrast_mode)

    if labels is None:
        labels_i32 = jnp.arange(bsz, dtype=jnp.int32)      # SimCLR case: eye(bsz) mask
    else:
        labels_i32 = jnp.asarray(labels).reshape(-1).astype(jnp.int32)
        if labels_i32.shape[0] != bsz:
            raise ValueError('Num of labels does not match num of features')

    if contrast_mode == 'one':
        n_anchor = bsz
    elif contrast_mode == 'all':
        n_anchor = n_views * bsz
    else:
        raise ValueError('Unknown mode: {}'.format(contrast_mode))

    n = n_views * bsz
    tile = min(128, _round_up(max(n, 8), 8))
    n_pad = _round_up(n, tile)

    # contrast_feature = cat(unbind(features, 1), 0) -> view-major [N, D].
    # Fold 1/temperature into the shared operand (sqrt, since it feeds both sides of the
    # Gram matrix), cast to bf16 for the MXU, pad rows to the tile multiple.
    cf = jnp.transpose(features, (1, 0, 2)).reshape(n, d).astype(jnp.float32)
    cf = cf * (1.0 / float(temperature)) ** 0.5
    cf = jnp.pad(cf, ((0, n_pad - n), (0, 0))).astype(jnp.bfloat16)

    tiled_labels = jnp.tile(labels_i32, (n_views,))        # label of row i = labels[i % bsz]
    tiled_labels = jnp.pad(tiled_labels, (0, n_pad - n))
    lab_rows = tiled_labels.reshape(n_pad, 1)
    lab_cols = tiled_labels.reshape(1, n_pad)

    grid = (n_pad // tile, n_pad // tile)

    # Rough VMEM budget (double-buffered bf16 feature streams + labels + out + scratch),
    # generous headroom, capped well below v7x's 64 MiB physical VMEM.
    est = (2 * (2 * tile * d * 2) + 2 * (2 * tile * 4) * 2
           + 2 * tile * 4 + 4 * tile * 4)
    vmem_limit = int(min(64 * 2 ** 20, max(4 * 2 ** 20, 8 * est)))

    kernel = functools.partial(
        _supcon_kernel, n_valid=n, tile=tile,
        loss_scale=float(temperature / base_temperature))

    per_anchor = pl.pallas_call(
        kernel,
        out_shape=jax.ShapeDtypeStruct((n_pad, 1), jnp.float32),
        grid=grid,
        in_specs=[
            pl.BlockSpec((tile, d), lambda ri, ci: (ri, 0)),   # anchor row tile
            pl.BlockSpec((tile, d), lambda ri, ci: (ci, 0)),   # contrast col tile
            pl.BlockSpec((tile, 1), lambda ri, ci: (ri, 0)),   # row labels
            pl.BlockSpec((1, tile), lambda ri, ci: (0, ci)),   # col labels
        ],
        out_specs=pl.BlockSpec((tile, 1), lambda ri, ci: (ri, 0)),
        scratch_shapes=[pltpu.VMEM((tile, 1), jnp.float32)] * 4,  # m, l, pos-sum, pos-count
        compiler_params=pltpu.CompilerParams(
            dimension_semantics=("parallel", "arbitrary"),
            vmem_limit_bytes=vmem_limit),
    )(cf, cf, lab_rows, lab_cols)

    # loss.view(anchor_count, batch_size).mean() == mean over the first n_anchor rows
    # (padded rows, if any, are sliced away here).
    return jnp.mean(per_anchor[:n_anchor, 0])


if __name__ == "__main__":
    key = jax.random.PRNGKey(0)
    kf, kl, kf2, kl2 = jax.random.split(key, 4)

    # Case 1: tile-aligned — bsz=8, n_views=2 -> N=16 anchors, D=128 (lane-aligned).
    bsz, n_views, feat_dim = 8, 2, 128
    feats = jax.random.normal(kf, (bsz, n_views, feat_dim), dtype=jnp.float32)
    feats = feats / jnp.linalg.norm(feats, axis=-1, keepdims=True)  # SupCon expects L2-normalized
    labels = jax.random.randint(kl, (bsz,), 0, 3)

    loss = jax.block_until_ready(supcon_loss(feats, labels=labels))
    base_mask = (labels.reshape(-1, 1) == labels.reshape(1, -1)).astype(jnp.float32)
    ref = _supcon_reference(feats, base_mask)
    assert jnp.allclose(loss, ref, rtol=2e-2, atol=2e-2), (loss, ref)

    # Case 2: non-tile-aligned N exercising the in-kernel padding masks (N=10 -> padded to 16).
    bsz2, n_views2 = 5, 2
    feats2 = jax.random.normal(kf2, (bsz2, n_views2, feat_dim), dtype=jnp.float32)
    feats2 = feats2 / jnp.linalg.norm(feats2, axis=-1, keepdims=True)
    labels2 = jax.random.randint(kl2, (bsz2,), 0, 3)

    loss2 = jax.block_until_ready(supcon_loss(feats2, labels=labels2))
    base_mask2 = (labels2.reshape(-1, 1) == labels2.reshape(1, -1)).astype(jnp.float32)
    ref2 = _supcon_reference(feats2, base_mask2)
    assert jnp.allclose(loss2, ref2, rtol=2e-2, atol=2e-2), (loss2, ref2)

    print("KERNEL_OK")
</pallas_src>

<mosaic_0001>
module attributes {stable_mosaic.version = 11 : i64} {
  func.func @_supcon_kernel(%arg0: i32, %arg1: i32, %arg2: memref<16x128xbf16, #tpu.memory_space<vmem>>, %arg3: memref<16x128xbf16, #tpu.memory_space<vmem>>, %arg4: memref<16x1xi32, #tpu.memory_space<vmem>>, %arg5: memref<1x16xi32, #tpu.memory_space<vmem>>, %arg6: memref<16x1xf32, #tpu.memory_space<vmem>>, %arg7: memref<16x1xf32, #tpu.memory_space<vmem>>, %arg8: memref<16x1xf32, #tpu.memory_space<vmem>>, %arg9: memref<16x1xf32, #tpu.memory_space<vmem>>, %arg10: memref<16x1xf32, #tpu.memory_space<vmem>>) attributes {dimension_semantics = [#tpu.dimension_semantics<parallel>, #tpu.dimension_semantics<arbitrary>], iteration_bounds = array<i64: 1, 1>, scalar_prefetch = 0 : i64, scratch_operands = 4 : i64, tpu.core_type = #tpu.core_type<tc>, window_params = [{transform_indices = @transform_0, window_bounds = array<i64: 16, 128>}, {transform_indices = @transform_1, window_bounds = array<i64: 16, 128>}, {transform_indices = @transform_2, window_bounds = array<i64: 16, 1>}, {transform_indices = @transform_3, window_bounds = array<i64: 1, 16>}, {transform_indices = @transform_4, window_bounds = array<i64: 16, 1>}]} {
    %c0_i32 = arith.constant 0 : i32
    %0 = arith.cmpi eq, %arg1, %c0_i32 : i32
    %1 = arith.extui %0 : i1 to i32
    %c0_i32_0 = arith.constant 0 : i32
    %2 = arith.cmpi ne, %1, %c0_i32_0 : i32
    scf.if %2 {
      %cst_33 = arith.constant -1.000000e+30 : f32
      %60 = vector.broadcast %cst_33 : f32 to vector<16x1xf32>
      %c0_34 = arith.constant 0 : index
      %c0_35 = arith.constant 0 : index
      %61 = vector.load %arg7[%c0_34, %c0_35] : memref<16x1xf32, #tpu.memory_space<vmem>>, vector<16x1xf32>
      tpu.vector_store %arg7[%c0_34, %c0_35], %60 {strides = array<i32>} : memref<16x1xf32, #tpu.memory_space<vmem>>, vector<16x1xf32>,
      %cst_36 = arith.constant 0.000000e+00 : f32
      %62 = vector.broadcast %cst_36 : f32 to vector<16x1xf32>
      %c0_37 = arith.constant 0 : index
      %c0_38 = arith.constant 0 : index
      %63 = vector.load %arg8[%c0_37, %c0_38] : memref<16x1xf32, #tpu.memory_space<vmem>>, vector<16x1xf32>
      tpu.vector_store %arg8[%c0_37, %c0_38], %62 {strides = array<i32>} : memref<16x1xf32, #tpu.memory_space<vmem>>, vector<16x1xf32>,
      %cst_39 = arith.constant 0.000000e+00 : f32
      %64 = vector.broadcast %cst_39 : f32 to vector<16x1xf32>
      %c0_40 = arith.constant 0 : index
      %c0_41 = arith.constant 0 : index
      %65 = vector.load %arg9[%c0_40, %c0_41] : memref<16x1xf32, #tpu.memory_space<vmem>>, vector<16x1xf32>
      tpu.vector_store %arg9[%c0_40, %c0_41], %64 {strides = array<i32>} : memref<16x1xf32, #tpu.memory_space<vmem>>, vector<16x1xf32>,
      %cst_42 = arith.constant 0.000000e+00 : f32
      %66 = vector.broadcast %cst_42 : f32 to vector<16x1xf32>
      %c0_43 = arith.constant 0 : index
      %c0_44 = arith.constant 0 : index
      %67 = vector.load %arg10[%c0_43, %c0_44] : memref<16x1xf32, #tpu.memory_space<vmem>>, vector<16x1xf32>
      tpu.vector_store %arg10[%c0_43, %c0_44], %66 {strides = array<i32>} : memref<16x1xf32, #tpu.memory_space<vmem>>, vector<16x1xf32>,
    } else {
    }
    %c0 = arith.constant 0 : index
    %c0_1 = arith.constant 0 : index
    %3 = vector.load %arg2[%c0, %c0_1] : memref<16x128xbf16, #tpu.memory_space<vmem>>, vector<16x128xbf16>
    %c0_2 = arith.constant 0 : index
    %c0_3 = arith.constant 0 : index
    %4 = vector.load %arg3[%c0_2, %c0_3] : memref<16x128xbf16, #tpu.memory_space<vmem>>, vector<16x128xbf16>
    %cst = arith.constant dense<0.000000e+00> : vector<16x16xf32>
    %5 = tpu.matmul %3, %4, %cst {dimension_numbers = #tpu.dot_dimension_numbers<[1], [1], [0], [0], [0, 0, 1, 0], [], []>} : vector<16x128xbf16>, vector<16x128xbf16>, vector<16x16xf32> -> vector<16x16xf32>
    %c16_i32 = arith.constant 16 : i32
    %6 = arith.muli %arg0, %c16_i32 : i32
    %7 = tpu.iota {dimensions = array<i32: 0>} : vector<16x16xi32>
    %8 = vector.broadcast %6 : i32 to vector<16x16xi32>
    %9 = arith.addi %8, %7 : vector<16x16xi32>
    %c16_i32_4 = arith.constant 16 : i32
    %10 = arith.muli %arg1, %c16_i32_4 : i32
    %11 = tpu.iota {dimensions = array<i32: 1>} : vector<16x16xi32>
    %12 = vector.broadcast %10 : i32 to vector<16x16xi32>
    %13 = arith.addi %12, %11 : vector<16x16xi32>
    %c16_i32_5 = arith.constant 16 : i32
    %14 = vector.broadcast %c16_i32_5 : i32 to vector<16x16xi32>
    %15 = arith.cmpi slt, %13, %14 : vector<16x16xi32>
    %16 = arith.cmpi ne, %9, %13 : vector<16x16xi32>
    %17 = arith.andi %15, %16 : vector<16x16xi1>
    %c0_6 = arith.constant 0 : index
    %c0_7 = arith.constant 0 : index
    %18 = vector.load %arg4[%c0_6, %c0_7] : memref<16x1xi32, #tpu.memory_space<vmem>>, vector<16x1xi32>
    %19 = vector.shape_cast %18 : vector<16x1xi32> to vector<16x1xi32>
    %20 = vector.broadcast %19 : vector<16x1xi32> to vector<16x16xi32>
    %c0_8 = arith.constant 0 : index
    %c0_9 = arith.constant 0 : index
    %21 = vector.load %arg5[%c0_8, %c0_9] : memref<1x16xi32, #tpu.memory_space<vmem>>, vector<1x16xi32>
    %22 = vector.shape_cast %21 : vector<1x16xi32> to vector<1x16xi32>
    %23 = vector.broadcast %22 : vector<1x16xi32> to vector<16x16xi32>
    %24 = arith.cmpi eq, %20, %23 : vector<16x16xi32>
    %25 = arith.andi %24, %17 : vector<16x16xi1>
    %26 = arith.extui %25 : vector<16x16xi1> to vector<16x16xi32>
    %27 = arith.sitofp %26 : vector<16x16xi32> to vector<16x16xf32>
    %cst_10 = arith.constant -1.000000e+30 : f32
    %28 = vector.broadcast %cst_10 : f32 to vector<16x16xf32>
    %29 = arith.select %17, %5, %28 : vector<16x16xi1>, vector<16x16xf32>
    %cst_11 = arith.constant dense<0xFF800000> : vector<16xf32>
    %30 = vector.multi_reduction <maximumf>, %29, %cst_11 [1] : vector<16x16xf32> to vector<16xf32>
    %31 = vector.shape_cast %30 : vector<16xf32> to vector<16x1xf32>
    %c0_12 = arith.constant 0 : index
    %c0_13 = arith.constant 0 : index
    %32 = vector.load %arg7[%c0_12, %c0_13] : memref<16x1xf32, #tpu.memory_space<vmem>>, vector<16x1xf32>
    %33 = arith.maximumf %32, %31 : vector<16x1xf32>
    %34 = arith.subf %32, %33 : vector<16x1xf32>
    %35 = math.exp %34 : vector<16x1xf32>
    %c0_14 = arith.constant 0 : index
    %c0_15 = arith.constant 0 : index
    %36 = vector.load %arg8[%c0_14, %c0_15] : memref<16x1xf32, #tpu.memory_space<vmem>>, vector<16x1xf32>
    %37 = arith.mulf %35, %36 : vector<16x1xf32>
    %38 = vector.broadcast %33 : vector<16x1xf32> to vector<16x16xf32>
    %39 = arith.subf %29, %38 : vector<16x16xf32>
    %40 = math.exp %39 : vector<16x16xf32>
    %cst_16 = arith.constant dense<0.000000e+00> : vector<16xf32>
    %41 = vector.multi_reduction <add>, %40, %cst_16 [1] : vector<16x16xf32> to vector<16xf32>
    %42 = vector.shape_cast %41 : vector<16xf32> to vector<16x1xf32>
    %43 = arith.addf %37, %42 : vector<16x1xf32>
    %c0_17 = arith.constant 0 : index
    %c0_18 = arith.constant 0 : index
    %44 = vector.load %arg8[%c0_17, %c0_18] : memref<16x1xf32, #tpu.memory_space<vmem>>, vector<16x1xf32>
    tpu.vector_store %arg8[%c0_17, %c0_18], %43 {strides = array<i32>} : memref<16x1xf32, #tpu.memory_space<vmem>>, vector<16x1xf32>,
    %c0_19 = arith.constant 0 : index
    %c0_20 = arith.constant 0 : index
    %45 = vector.load %arg7[%c0_19, %c0_20] : memref<16x1xf32, #tpu.memory_space<vmem>>, vector<16x1xf32>
    tpu.vector_store %arg7[%c0_19, %c0_20], %33 {strides = array<i32>} : memref<16x1xf32, #tpu.memory_space<vmem>>, vector<16x1xf32>,
    %c0_21 = arith.constant 0 : index
    %c0_22 = arith.constant 0 : index
    %46 = vector.load %arg9[%c0_21, %c0_22] : memref<16x1xf32, #tpu.memory_space<vmem>>, vector<16x1xf32>
    %47 = arith.mulf %27, %5 : vector<16x16xf32>
    %cst_23 = arith.constant dense<0.000000e+00> : vector<16xf32>
    %48 = vector.multi_reduction <add>, %47, %cst_23 [1] : vector<16x16xf32> to vector<16xf32>
    %49 = vector.shape_cast %48 : vector<16xf32> to vector<16x1xf32>
    %50 = arith.addf %46, %49 : vector<16x1xf32>
    %c0_24 = arith.constant 0 : index
    %c0_25 = arith.constant 0 : index
    %51 = vector.load %arg9[%c0_24, %c0_25] : memref<16x1xf32, #tpu.memory_space<vmem>>, vector<16x1xf32>
    tpu.vector_store %arg9[%c0_24, %c0_25], %50 {strides = array<i32>} : memref<16x1xf32, #tpu.memory_space<vmem>>, vector<16x1xf32>,
    %c0_26 = arith.constant 0 : index
    %c0_27 = arith.constant 0 : index
    %52 = vector.load %arg10[%c0_26, %c0_27] : memref<16x1xf32, #tpu.memory_space<vmem>>, vector<16x1xf32>
    %cst_28 = arith.constant dense<0.000000e+00> : vector<16xf32>
    %53 = vector.multi_reduction <add>, %27, %cst_28 [1] : vector<16x16xf32> to vector<16xf32>
    %54 = vector.shape_cast %53 : vector<16xf32> to vector<16x1xf32>
    %55 = arith.addf %52, %54 : vector<16x1xf32>
    %c0_29 = arith.constant 0 : index
    %c0_30 = arith.constant 0 : index
    %56 = vector.load %arg10[%c0_29, %c0_30] : memref<16x1xf32, #tpu.memory_space<vmem>>, vector<16x1xf32>
    tpu.vector_store %arg10[%c0_29, %c0_30], %55 {strides = array<i32>} : memref<16x1xf32, #tpu.memory_space<vmem>>, vector<16x1xf32>,
    %c0_i32_31 = arith.constant 0 : i32
    %57 = arith.cmpi eq, %arg1, %c0_i32_31 : i32
    %58 = arith.extui %57 : i1 to i32
    %c0_i32_32 = arith.constant 0 : i32
    %59 = arith.cmpi ne, %58, %c0_i32_32 : i32
    scf.if %59 {
      %c0_33 = arith.constant 0 : index
      %c0_34 = arith.constant 0 : index
      %60 = vector.load %arg7[%c0_33, %c0_34] : memref<16x1xf32, #tpu.memory_space<vmem>>, vector<16x1xf32>
      %c0_35 = arith.constant 0 : index
      %c0_36 = arith.constant 0 : index
      %61 = vector.load %arg8[%c0_35, %c0_36] : memref<16x1xf32, #tpu.memory_space<vmem>>, vector<16x1xf32>
      %62 = math.log %61 : vector<16x1xf32>
      %63 = arith.addf %60, %62 : vector<16x1xf32>
      %c0_37 = arith.constant 0 : index
      %c0_38 = arith.constant 0 : index
      %64 = vector.load %arg9[%c0_37, %c0_38] : memref<16x1xf32, #tpu.memory_space<vmem>>, vector<16x1xf32>
      %c0_39 = arith.constant 0 : index
      %c0_40 = arith.constant 0 : index
      %65 = vector.load %arg10[%c0_39, %c0_40] : memref<16x1xf32, #tpu.memory_space<vmem>>, vector<16x1xf32>
      %66 = tpu.reciprocal %65 {approx = true} : vector<16x1xf32> -> vector<16x1xf32>
      %67 = arith.mulf %64, %66 : vector<16x1xf32>
      %68 = arith.subf %67, %63 : vector<16x1xf32>
      %cst_41 = arith.constant -1.000000e+00 : f32
      %69 = vector.broadcast %cst_41 : f32 to vector<16x1xf32>
      %70 = arith.mulf %69, %68 : vector<16x1xf32>
      %c0_42 = arith.constant 0 : index
      %c0_43 = arith.constant 0 : index
      %71 = vector.load %arg6[%c0_42, %c0_43] : memref<16x1xf32, #tpu.memory_space<vmem>>, vector<16x1xf32>
      tpu.vector_store %arg6[%c0_42, %c0_43], %70 {strides = array<i32>} : memref<16x1xf32, #tpu.memory_space<vmem>>, vector<16x1xf32>,
    } else {
    }
    return
  }
  func.func @transform_0(%arg0: i32, %arg1: i32) -> (i32, i32) {
    %c0_i32 = arith.constant 0 : i32
    %c0_i32_0 = arith.constant 0 : i32
    return %arg0, %c0_i32 : i32, i32
  }
  func.func @transform_1(%arg0: i32, %arg1: i32) -> (i32, i32) {
    %c0_i32 = arith.constant 0 : i32
    %c0_i32_0 = arith.constant 0 : i32
    return %arg1, %c0_i32 : i32, i32
  }
  func.func @transform_2(%arg0: i32, %arg1: i32) -> (i32, i32) {
    %c0_i32 = arith.constant 0 : i32
    %c0_i32_0 = arith.constant 0 : i32
    return %arg0, %c0_i32 : i32, i32
  }
  func.func @transform_3(%arg0: i32, %arg1: i32) -> (i32, i32) {
    %c0_i32 = arith.constant 0 : i32
    %c0_i32_0 = arith.constant 0 : i32
    return %c0_i32, %arg1 : i32, i32
  }
  func.func @transform_4(%arg0: i32, %arg1: i32) -> (i32, i32) {
    %c0_i32 = arith.constant 0 : i32
    %c0_i32_0 = arith.constant 0 : i32
    return %arg0, %c0_i32 : i32, i32
  }
}

</mosaic_0001>

<llo_original>
// kernel: tpu_custom_call.1
$region0: #{tpu_custom_call.1}
  #allocation0 [shape = 'u32[]', space=smem, size = 0x4, offset = 0x4, fixed_abs, tag = 'smem constant byte address 0x4 - core index']
  #allocation1 [shape = 'u32[144,128]{1,0:T(1,128)}', space=vmem, size = 0x12000, scoped, tag = 'internal scratch']
  #allocation2 [shape = 'f32[16,1]{1,0:T(8,128)}', space=vmem, size = 0x2000, scoped, tag = 'scratch operand']
  #allocation3 [shape = 'f32[16,1]{1,0:T(8,128)}', space=vmem, size = 0x2000, scoped, tag = 'scratch operand']
  #allocation4 [shape = 'f32[16,1]{1,0:T(8,128)}', space=vmem, size = 0x2000, scoped, tag = 'scratch operand']
  #allocation5 [shape = 'f32[16,1]{1,0:T(8,128)}', space=vmem, size = 0x2000, scoped, tag = 'scratch operand']
  %s0 = inlined_call_operand.vmem [shape: bf16[16,128], index: 0, kind: input, shape index: {}]
  %s1 = inlined_call_operand.vmem [shape: bf16[16,128], index: 1, kind: input, shape index: {}]
  %s2 = inlined_call_operand.vmem [shape: s32[16,1], index: 2, kind: input, shape index: {}]
  %s3 = inlined_call_operand.vmem [shape: s32[1,16], index: 3, kind: input, shape index: {}]
  %s4 = inlined_call_operand.vmem [shape: f32[16,1], index: 4, kind: output, shape index: {}]
  %s5 = sld [smem:[#allocation0]]
  $region34: #{tpu_custom_call.1} parent=0
    _
  %s7 = ssub.s32 1, %s5
  %s8 = scalar_select 0, %s7, %s5
  // Predicated region
  $region2: #{tpu_custom_call.1} parent=0 // pred_check
    _
  $region3: #{tpu_custom_call.1} parent=0 // pred_check_branch
    %10 = sbr.rel (0) target = $region5
  $region4: #{tpu_custom_call.1} parent=0 // pred_region
    _
  $region5: #{tpu_custom_call.1} parent=0 // pred_fallthru
    _
  // Predicated region
  $region6: #{tpu_custom_call.1} parent=0 // pred_check
    _
  $region7: #{tpu_custom_call.1} parent=0 // pred_check_branch
    %12 = sbr.rel (0) target = $region9
  $region8: #{tpu_custom_call.1} parent=0 // pred_region
    _
  $region9: #{tpu_custom_call.1} parent=0 // pred_fallthru
    _
  // Predicated region
  $region10: #{tpu_custom_call.1} parent=0 // pred_check
    _
  $region11: #{tpu_custom_call.1} parent=0 // pred_check_branch
    %14 = sbr.rel (0) target = $region13
  $region12: #{tpu_custom_call.1} parent=0 // pred_region
    _
  $region13: #{tpu_custom_call.1} parent=0 // pred_fallthru
    _
  // Predicated region
  $region14: #{tpu_custom_call.1} parent=0 // pred_check
    _
  $region15: #{tpu_custom_call.1} parent=0 // pred_check_branch
    %16 = sbr.rel (0) target = $region17
  $region16: #{tpu_custom_call.1} parent=0 // pred_region
    _
  $region17: #{tpu_custom_call.1} parent=0 // pred_fallthru
    _
  %p18 = scmp.eq.s32.totalorder 0, 0
  // Predicated region
  $region18: #{tpu_custom_call.1} parent=0 // pred_check
    %p19 = pneg %p18
  $region19: #{tpu_custom_call.1} parent=0 // pred_check_branch
    %21 = sbr.rel (%p19) target = $region21
  $region20: #{tpu_custom_call.1} parent=0 // pred_region
    %vm22 = vcmask 7168
    %23 = vst.msk [vmem:[#allocation2] sm:$0xff] %vm22, -1e+30
    %24 = vst.msk [vmem:[#allocation2 + $0x8] sm:$0xff] %vm22, -1e+30
    %25 = vst.msk [vmem:[#allocation3] sm:$0xff] %vm22, 0.0
    %26 = vst.msk [vmem:[#allocation3 + $0x8] sm:$0xff] %vm22, 0.0
    %27 = vst.msk [vmem:[#allocation4] sm:$0xff] %vm22, 0.0
    %28 = vst.msk [vmem:[#allocation4 + $0x8] sm:$0xff] %vm22, 0.0
    %29 = vst.msk [vmem:[#allocation5] sm:$0xff] %vm22, 0.0
    %30 = vst.msk [vmem:[#allocation5 + $0x8] sm:$0xff] %vm22, 0.0
  $region21: #{tpu_custom_call.1} parent=0 // pred_fallthru
    _
  %v31 = vld [vmem:[%s0] sm:$0xf]
  %v32 = vld [vmem:[%s0 + $0x4] sm:$0xf]
  %v33 = vld [vmem:[%s1] sm:$0xf]
  %v34 = vld [vmem:[%s1 + $0x4] sm:$0xf]
  %v37 = vunpack.c.l.b16 %v31
  %v38 = vunpack.c.l.b16 %v32
  %v39 = vpack.c.b16 %v38, %v37
  %v43 = vunpack.c.l.b16 %v33
  %v44 = vunpack.c.l.b16 %v34
  %v45 = vpack.c.b16 %v44, %v43
  %47 = vmatprep.subr.bf16.mxu0 0
  %48 = vmatpush1.bf16.xpose.msra.mxu0 %v45
  %49 = vmatprep.subr.bf16.mxu0 0
  %50 = vmatpush1.bf16.xpose.msra.mxu0 0
  %51 = vmatprep.subr.bf16.mxu0 0
  %52 = vmatpush1.bf16.xpose.msra.mxu0 0
  %53 = vmatprep.subr.bf16.mxu0 0
  %54 = vmatpush1.bf16.xpose.msra.mxu0 0
  %55 = vmatprep.subr.bf16.mxu0 0
  %56 = vmatpush1.bf16.xpose.msra.mxu0 0
  %57 = vmatprep.subr.bf16.mxu0 0
  %58 = vmatpush1.bf16.xpose.msra.mxu0 0
  %59 = vmatprep.subr.bf16.mxu0 0
  %60 = vmatpush1.bf16.xpose.msra.mxu0 0
  %61 = vmatprep.subr.bf16.mxu0 0
  %62 = vmatpush1.bf16.xpose.msra.mxu0 0
  %63 = vmatprep.subr.bf16.mxu0 0
  %64 = vmatpush1.bf16.xpose.msra.mxu0 0
  %65 = vmatprep.subr.bf16.mxu0 0
  %66 = vmatpush1.bf16.xpose.msra.mxu0 0
  %67 = vmatprep.subr.bf16.mxu0 0
  %68 = vmatpush1.bf16.xpose.msra.mxu0 0
  %69 = vmatprep.subr.bf16.mxu0 0
  %70 = vmatpush1.bf16.xpose.msra.mxu0 0
  %71 = vmatprep.subr.bf16.mxu0 0
  %72 = vmatpush1.bf16.xpose.msra.mxu0 0
  %73 = vmatprep.subr.bf16.mxu0 0
  %74 = vmatpush1.bf16.xpose.msra.mxu0 0
  %75 = vmatprep.subr.bf16.mxu0 0
  %76 = vmatpush1.bf16.xpose.msra.mxu0 0
  %77 = vmatprep.subr.bf16.mxu0 0
  %78 = vmatpush1.bf16.xpose.msra.mxu0 0
  %79 = vmatprep.mubr.bf16.mxu0 0
  %80 = vmatmul.mubr.bf16.gmra.mrb[0].mxu0 %v39
  %v81 = vpop.f32.mrb[0].mxu0
  %v82 = vadd.f32 0.0, %v81
  %v83 = vpop.f32.mrb[0].mxu0
  %v84 = vpop.f32.mrb[0].mxu0
  %v85 = vadd.f32 0.0, %v84
  %v86 = vpop.f32.mrb[0].mxu0
  %87 = vdwg.mxu0
  %s88 = smul.u32 0, 16
  %v89 = vlaneseq
  %v90 = vshrl.u32 %v89, 7
  %v91 = vadd.s32 %v90, 8
  %v92 = vstv %s88
  %v93 = vadd.s32 %v92, %v90
  %v94 = vadd.s32 %v92, %v91
  %s95 = smul.u32 0, 16
  %v96 = vlaneseq
  %v97 = vand.u32 %v96, 127
  %v98 = vstv %s95
  %v99 = vadd.s32 %v98, %v97
  %vm100 = vcmp.lt.s32.totalorder %v99, 16
  %vm101 = vcmp.ne.s32.totalorder %v93, %v99
  %vm102 = vcmp.ne.s32.totalorder %v94, %v99
  %vm103 = vmand %vm100, %vm101
  %vm104 = vmand %vm100, %vm102
  %v105 = vld [vmem:[%s2] sm:$0xff]
  %v106 = vld [vmem:[%s2 + $0x8] sm:$0xff]
  %107 = vset.pattern.permute.xlu0 0
  %108 = vperm.xlu0 %107, %v105
  %v109 = vpop.permute.xlu0 %108
  %110 = vset.pattern.permute.xlu0 0
  %111 = vperm.xlu0 %110, %v106
  %v112 = vpop.permute.xlu0 %111
  %v113 = vld [vmem:[%s3] sm:$0x1]
  %v114 = vlaneseq
  %v115 = vshrl.u32 %v114, 7
  %v116 = vsub.s32 0, %v115
  %v117 = vrot.slane %v113, %v116
  %vm118 = vcmp.eq.s32.totalorder %v109, %v117
  %vm119 = vcmp.eq.s32.totalorder %v112, %v117
  %vm120 = vmand %vm118, %vm103
  %vm121 = vmand %vm119, %vm104
  %v122 = vsel %vm120, 1, 0
  %v123 = vsel %vm121, 1, 0
  %v124 = vcvt.s32.f32 %v122
  %v125 = vcvt.s32.f32 %v123
  %v126 = vsel %vm103, %v82, -1e+30
  %v127 = vsel %vm104, %v85, -1e+30
  %vm128 = vcmask 130048
  %v129 = vsel %vm128, %v126, -inf
  %130 = vmax.xlane.f32.xlu0 %v129
  %v131 = vpop.xlane.xlu0 %130
  %v132 = vsel %vm128, %v127, -inf
  %133 = vmax.xlane.f32.xlu0 %v132
  %v134 = vpop.xlane.xlu0 %133
  %v135 = vld [vmem:[#allocation2] sm:$0xff]
  %v136 = vld [vmem:[#allocation2 + $0x8] sm:$0xff]
  %v137 = vmax.f32 %v135, %v131
  %v138 = vmax.f32 %v136, %v134
  %v139 = vsub.f32 %v135, %v137
  %v140 = vsub.f32 %v136, %v138
  %v141 = vmul.f32 %v139, 1.442695
  %v142 = vpow.pop %v141
  %v143 = vmul.f32 %v140, 1.442695
  %v144 = vpow.pop %v143
  %v145 = vld [vmem:[#allocation3] sm:$0xff]
  %v146 = vld [vmem:[#allocation3 + $0x8] sm:$0xff]
  %v147 = vmul.f32 %v142, %v145
  %v148 = vmul.f32 %v144, %v146
  %150 = vset.pattern.permute.xlu0 0
  %151 = vperm.xlu0 %150, %v137
  %v152 = vpop.permute.xlu0 %151
  %155 = vset.pattern.permute.xlu0 0
  %156 = vperm.xlu0 %155, %v138
  %v157 = vpop.permute.xlu0 %156
  %v159 = vsub.f32 %v126, %v152
  %v160 = vsub.f32 %v127, %v157
  %v161 = vmul.f32 %v159, 1.442695
  %v162 = vpow.pop %v161
  %v163 = vmul.f32 %v160, 1.442695
  %v164 = vpow.pop %v163
  %v165 = vsel %vm128, %v162, 0.0
  %166 = vadd.xlane.f32.xlu0 %v165
  %v167 = vpop.xlane.xlu0 %166
  %v168 = vsel %vm128, %v164, 0.0
  %169 = vadd.xlane.f32.xlu0 %v168
  %v170 = vpop.xlane.xlu0 %169
  %v171 = vadd.f32 %v147, %v167
  %v172 = vadd.f32 %v148, %v170
  %vm173 = vcmask 7168
  %174 = vst.msk [vmem:[#allocation3] sm:$0xff] %vm173, %v171
  %175 = vst.msk [vmem:[#allocation3 + $0x8] sm:$0xff] %vm173, %v172
  %176 = vst.msk [vmem:[#allocation2] sm:$0xff] %vm173, %v137
  %177 = vst.msk [vmem:[#allocation2 + $0x8] sm:$0xff] %vm173, %v138
  %v178 = vld [vmem:[#allocation4] sm:$0xff]
  %v179 = vld [vmem:[#allocation4 + $0x8] sm:$0xff]
  %v180 = vmul.f32 %v124, %v82
  %v181 = vmul.f32 %v125, %v85
  %v182 = vsel %vm128, %v180, 0.0
  %183 = vadd.xlane.f32.xlu0 %v182
  %v184 = vpop.xlane.xlu0 %183
  %v185 = vsel %vm128, %v181, 0.0
  %186 = vadd.xlane.f32.xlu0 %v185
  %v187 = vpop.xlane.xlu0 %186
  %v188 = vadd.f32 %v178, %v184
  %v189 = vadd.f32 %v179, %v187
  %190 = vst.msk [vmem:[#allocation4] sm:$0xff] %vm173, %v188
  %191 = vst.msk [vmem:[#allocation4 + $0x8] sm:$0xff] %vm173, %v189
  %v192 = vld [vmem:[#allocation5] sm:$0xff]
  %v193 = vld [vmem:[#allocation5 + $0x8] sm:$0xff]
  %v194 = vsel %vm128, %v124, 0.0
  %195 = vadd.xlane.f32.xlu0 %v194
  %v196 = vpop.xlane.xlu0 %195
  %v197 = vsel %vm128, %v125, 0.0
  %198 = vadd.xlane.f32.xlu0 %v197
  %v199 = vpop.xlane.xlu0 %198
  %v200 = vadd.f32 %v192, %v196
  %v201 = vadd.f32 %v193, %v199
  %202 = vst.msk [vmem:[#allocation5] sm:$0xff] %vm173, %v200
  %203 = vst.msk [vmem:[#allocation5 + $0x8] sm:$0xff] %vm173, %v201
  // Predicated region
  $region22: #{tpu_custom_call.1} parent=0 // pred_check
    %p204 = pneg %p18
  $region23: #{tpu_custom_call.1} parent=0 // pred_check_branch
    %206 = sbr.rel (%p204) target = $region25
  $region24: #{tpu_custom_call.1} parent=0 // pred_region
    %v207 = vld [vmem:[#allocation2] sm:$0xff]
    %v208 = vld [vmem:[#allocation2 + $0x8] sm:$0xff]
    %v209 = vld [vmem:[#allocation3] sm:$0xff]
    %v210 = vld [vmem:[#allocation3 + $0x8] sm:$0xff]
    %v211 = vlog2.pop %v209
    %v212 = vmul.f32 %v211, 0.6931472
    %v213 = vlog2.pop %v210
    %v214 = vmul.f32 %v213, 0.6931472
    %v215 = vadd.f32 %v207, %v212
    %v216 = vadd.f32 %v208, %v214
    %v217 = vld [vmem:[#allocation4] sm:$0xff]
    %v218 = vld [vmem:[#allocation4 + $0x8] sm:$0xff]
    %v219 = vld [vmem:[#allocation5] sm:$0xff]
    %v220 = vld [vmem:[#allocation5 + $0x8] sm:$0xff]
    %v221 = vrcp.pop %v219
    %v222 = vrcp.pop %v220
    %v223 = vmul.f32 %v217, %v221
    %v224 = vmul.f32 %v218, %v222
    %v225 = vsub.f32 %v223, %v215
    %v226 = vsub.f32 %v224, %v216
    %v227 = vmul.f32 %v225, -1.0
    %v228 = vmul.f32 %v226, -1.0
    %229 = vst.msk [vmem:[%s4] sm:$0xff] %vm173, %v227
    %230 = vst.msk [vmem:[%s4 + $0x8] sm:$0xff] %vm173, %v228
  $region25: #{tpu_custom_call.1} parent=0 // pred_fallthru
    _
  // Predicated region
  $region26: #{tpu_custom_call.1} parent=0 // pred_check
    _
  $region27: #{tpu_custom_call.1} parent=0 // pred_check_branch
    %232 = sbr.rel (0) target = $region29
  $region28: #{tpu_custom_call.1} parent=0 // pred_region
    _
  $region29: #{tpu_custom_call.1} parent=0 // pred_fallthru
    _
  // Predicated region
  $region30: #{tpu_custom_call.1} parent=0 // pred_check
    _
  $region31: #{tpu_custom_call.1} parent=0 // pred_check_branch
    %234 = sbr.rel (0) target = $region33
  $region32: #{tpu_custom_call.1} parent=0 // pred_region
    _
  $region33: #{tpu_custom_call.1} parent=0 // pred_fallthru
    _

</llo_original>
